<compile_context>
chip_gen: v5e
topology: v5e:2x2
jax: 0.10.0
libtpu: 0.0.40
codegen_flags: <defaults>
</compile_context>

<pallas_src>
import jax
import jax.numpy as jnp
from jax.experimental import pallas as pl
from jax.experimental.pallas import tpu as pltpu


_LANES = 128
_SMALL_FALLBACK_ELEMS = 256 * 1024        # ~1 MiB f32: below this, fused XLA is faster
_V5_TILE_BUDGET = 2 * 1024 * 1024         # per-step input-tile bytes on v5 (tight scoped VMEM)
_DEFAULT_TILE_BUDGET = 4 * 1024 * 1024    # per-step input-tile bytes on v6e / v7x


def _sublane_pack(dtype) -> int:
    """Rows per packed sublane group: 8 (f32), 16 (bf16/f16), 32 (int8/fp8)."""
    itemsize = jnp.dtype(dtype).itemsize
    return max(8, 8 * (4 // max(1, itemsize)))


def _default_tile_budget_bytes() -> int:
    try:
        kind = jax.devices()[0].device_kind.lower()
    except Exception:
        kind = ""
    return _V5_TILE_BUDGET if "v5" in kind else _DEFAULT_TILE_BUDGET


def _compiler_params(in_tile_bytes: int, n_grid_axes: int) -> pltpu.CompilerParams:
    # Per step: input tile + 2x-sized output tile, each double-buffered  ->  ~6x input tile.
    vmem_limit = max(16 << 20, min(48 << 20, 6 * int(in_tile_bytes) + (8 << 20)))
    return pltpu.CompilerParams(
        dimension_semantics=("parallel",) * n_grid_axes,
        vmem_limit_bytes=int(vmem_limit),
    )


def _relu_cat_tanh_lane_kernel(x_ref, o_ref):
    """x_ref: (TB, TR, 128); o_ref: (TB, 2, TR, 128). Compute once, store twice."""
    y = jnp.tanh(jnp.maximum(x_ref[...], 0.0)).astype(o_ref.dtype)
    o_ref[:, 0, :, :] = y
    o_ref[:, 1, :, :] = y


def _relu_cat_tanh_flat_kernel(x_ref, o_ref):
    """x_ref: (TB, N); o_ref: (TB, 2, N). Compute once, store twice."""
    y = jnp.tanh(jnp.maximum(x_ref[...], 0.0)).astype(o_ref.dtype)
    o_ref[:, 0, :] = y
    o_ref[:, 1, :] = y


def _lane_dense_path(x: jax.Array, budget: int) -> jax.Array:
    """View (B, S, D) lane-dense as (B, R, 128); output (B, 2, R, 128) -> (B, 2S, D)."""
    b, s, d = x.shape
    n = s * d
    itemsize = jnp.dtype(x.dtype).itemsize
    pack = _sublane_pack(x.dtype)

    n_pad = ((n + _LANES - 1) // _LANES) * _LANES
    xf = x.reshape(b, n)
    if n_pad != n:
        # TODO(synk): rare fallback (huge, non-128-aligned per-batch rows); costs one
        # extra HBM pass for the pad + output slice.
        xf = jnp.pad(xf, ((0, 0), (0, n_pad - n)))
    r = n_pad // _LANES
    x3 = xf.reshape(b, r, _LANES)

    rows_budget = max(pack, budget // (_LANES * itemsize))
    if r <= rows_budget:
        tr = r                                   # full row extent: always legal
        tb = min(b, max(1, rows_budget // r))    # batch-tile to keep steps ~budget-sized
    else:
        tr = max(pack, (rows_budget // pack) * pack)
        tb = 1

    grid = (pl.cdiv(b, tb), pl.cdiv(r, tr))
    in_tile_bytes = tb * tr * _LANES * itemsize

    out = pl.pallas_call(
        _relu_cat_tanh_lane_kernel,
        out_shape=jax.ShapeDtypeStruct((b, 2, r, _LANES), x.dtype),
        grid=grid,
        in_specs=[pl.BlockSpec((tb, tr, _LANES), lambda bi, ri: (bi, ri, 0))],
        out_specs=pl.BlockSpec((tb, 2, tr, _LANES), lambda bi, ri: (bi, 0, ri, 0)),
        compiler_params=_compiler_params(in_tile_bytes, 2),
    )(x3)

    out = out.reshape(b, 2, n_pad)
    if n_pad != n:
        out = out[:, :, :n]
    return out.reshape(b, 2 * s, d)


def _flat_path(x: jax.Array, tb: int) -> jax.Array:
    """Native-layout path for S*D not a multiple of 128: block (TB, N) -> (TB, 2, N)."""
    b, s, d = x.shape
    n = s * d
    itemsize = jnp.dtype(x.dtype).itemsize
    xf = x.reshape(b, n)

    n_vmem = ((n + _LANES - 1) // _LANES) * _LANES   # lane-padded VMEM footprint
    in_tile_bytes = tb * n_vmem * itemsize

    out = pl.pallas_call(
        _relu_cat_tanh_flat_kernel,
        out_shape=jax.ShapeDtypeStruct((b, 2, n), x.dtype),
        grid=(pl.cdiv(b, tb),),
        in_specs=[pl.BlockSpec((tb, n), lambda bi: (bi, 0))],
        out_specs=pl.BlockSpec((tb, 2, n), lambda bi: (bi, 0, 0)),
        compiler_params=_compiler_params(in_tile_bytes, 1),
    )(xf)
    return out.reshape(b, 2 * s, d)


def relu_cat_tanh(
    x: jax.Array,
    *,
    small_fallback_elems: int = _SMALL_FALLBACK_ELEMS,
    tile_budget_bytes: int | None = None,
) -> jax.Array:
    """y = tanh(cat([relu(x), relu(x)], dim=-2)) for a 3-D x of shape (B, S, D)."""
    assert x.ndim == 3, "this model path only handles 3-D inputs"
    b, s, d = x.shape
    n = s * d
    itemsize = jnp.dtype(x.dtype).itemsize

    # Small-input (or unsupported-dtype) fast path: let XLA fuse the tiny elementwise op.
    if x.size < small_fallback_elems or itemsize > 4:
        y = jnp.maximum(x, 0)
        return jnp.tanh(jnp.concatenate([y, y], axis=-2))

    budget = tile_budget_bytes if tile_budget_bytes is not None else _default_tile_budget_bytes()

    if n % _LANES == 0:
        return _lane_dense_path(x, budget)

    # Unaligned per-batch row: keep native layout (full-extent last dim, masked lane
    # stores) instead of pad + slice (which would triple HBM traffic).
    pack = _sublane_pack(x.dtype)
    row_bytes = n * itemsize
    tb_fit = budget // max(1, row_bytes)
    if tb_fit >= b:
        return _flat_path(x, b)
    if tb_fit >= pack:
        return _flat_path(x, (tb_fit // pack) * pack)
    # Huge, unaligned per-batch rows: fall back to the padded lane-dense path.
    return _lane_dense_path(x, budget)


def reference(x: jax.Array) -> jax.Array:
    y = jnp.maximum(x, 0.0)
    y = jnp.concatenate([y, y], axis=-2)
    return jnp.tanh(y)


if __name__ == "__main__":
    key = jax.random.PRNGKey(0)
    keys = jax.random.split(key, 6)

    # 1) Exact spec shape from the PyTorch module (tiny -> fused-XLA fast path).
    x_spec = jax.random.normal(keys[0], (2, 3, 4), dtype=jnp.float32)
    out_spec = jax.block_until_ready(relu_cat_tanh(x_spec))
    assert out_spec.shape == (2, 6, 4)
    assert jnp.allclose(out_spec, reference(x_spec), atol=1e-6), "mismatch (spec shape)"

    # 2) Lane-aligned shape forced through the Pallas kernel (single batch-tiled step).
    x_a = jax.random.normal(keys[1], (2, 16, 128), dtype=jnp.float32)
    out_a = jax.block_until_ready(relu_cat_tanh(x_a, small_fallback_elems=0))
    assert out_a.shape == (2, 32, 128)
    assert jnp.allclose(out_a, reference(x_a), atol=1e-6), "mismatch (aligned shape)"

    # 3) Row-tiled grid with a ragged last row block (R=40, TR=16 -> 3 row tiles).
    x_b = jax.random.normal(keys[2], (4, 40, 128), dtype=jnp.float32)
    out_b = jax.block_until_ready(
        relu_cat_tanh(x_b, small_fallback_elems=0, tile_budget_bytes=8 * 1024))
    assert out_b.shape == (4, 80, 128)
    assert jnp.allclose(out_b, reference(x_b), atol=1e-6), "mismatch (ragged row tiles)"

    # 4) Unaligned S*D -> native-layout flat path (no pad, masked lane stores).
    x_c = jax.random.normal(keys[3], (2, 33, 40), dtype=jnp.float32)
    out_c = jax.block_until_ready(relu_cat_tanh(x_c, small_fallback_elems=0))
    assert out_c.shape == (2, 66, 40)
    assert jnp.allclose(out_c, reference(x_c), atol=1e-6), "mismatch (unaligned flat path)"

    # 5) Large-B / small-(S*D): batch-tiled grid with a ragged last batch block.
    x_d = jax.random.normal(keys[4], (66, 4, 32), dtype=jnp.float32)
    out_d = jax.block_until_ready(
        relu_cat_tanh(x_d, small_fallback_elems=0, tile_budget_bytes=16 * 1024))
    assert out_d.shape == (66, 8, 32)
    assert jnp.allclose(out_d, reference(x_d), atol=1e-6), "mismatch (batch-tiled grid)"

    # 6) Above the default fallback threshold: full default (generation-aware) tiling.
    x_e = jax.random.normal(keys[5], (4, 512, 192), dtype=jnp.float32)
    out_e = jax.block_until_ready(relu_cat_tanh(x_e))
    assert out_e.shape == (4, 1024, 192)
    assert jnp.allclose(out_e, reference(x_e), atol=1e-6), "mismatch (default path)"

    print("KERNEL_OK")
</pallas_src>

<mosaic_0001>
module attributes {stable_mosaic.version = 11 : i64} {
  func.func @_relu_cat_tanh_lane_kernel(%arg0: i32, %arg1: i32, %arg2: memref<2x16x128xf32, #tpu.memory_space<vmem>>, %arg3: memref<2x2x16x128xf32, #tpu.memory_space<vmem>>) attributes {dimension_semantics = [#tpu.dimension_semantics<parallel>, #tpu.dimension_semantics<parallel>], iteration_bounds = array<i64: 1, 1>, scalar_prefetch = 0 : i64, scratch_operands = 0 : i64, tpu.core_type = #tpu.core_type<tc>, window_params = [{transform_indices = @transform_0, window_bounds = array<i64: 2, 16, 128>}, {transform_indices = @transform_1, window_bounds = array<i64: 2, 2, 16, 128>}]} {
    %c0 = arith.constant 0 : index
    %c0_0 = arith.constant 0 : index
    %c0_1 = arith.constant 0 : index
    %0 = vector.load %arg2[%c0, %c0_0, %c0_1] : memref<2x16x128xf32, #tpu.memory_space<vmem>>, vector<2x16x128xf32>
    %cst = arith.constant 0.000000e+00 : f32
    %1 = vector.broadcast %cst : f32 to vector<2x16x128xf32>
    %2 = arith.maximumf %0, %1 : vector<2x16x128xf32>
    %3 = math.tanh %2 : vector<2x16x128xf32>
    %c0_2 = arith.constant 0 : index
    %c0_3 = arith.constant 0 : index
    %c0_4 = arith.constant 0 : index
    %c0_5 = arith.constant 0 : index
    %4 = vector.load %arg3[%c0_2, %c0_3, %c0_4, %c0_5] : memref<2x2x16x128xf32, #tpu.memory_space<vmem>>, vector<2x1x16x128xf32>
    %5 = vector.shape_cast %4 : vector<2x1x16x128xf32> to vector<2x16x128xf32>
    %6 = vector.shape_cast %3 : vector<2x16x128xf32> to vector<2x1x16x128xf32>
    tpu.vector_store %arg3[%c0_2, %c0_3, %c0_4, %c0_5], %6 {strides = array<i32>} : memref<2x2x16x128xf32, #tpu.memory_space<vmem>>, vector<2x1x16x128xf32>,
    %c0_6 = arith.constant 0 : index
    %c1 = arith.constant 1 : index
    %c0_7 = arith.constant 0 : index
    %c0_8 = arith.constant 0 : index
    %7 = vector.load %arg3[%c0_6, %c1, %c0_7, %c0_8] : memref<2x2x16x128xf32, #tpu.memory_space<vmem>>, vector<2x1x16x128xf32>
    %8 = vector.shape_cast %7 : vector<2x1x16x128xf32> to vector<2x16x128xf32>
    %9 = vector.shape_cast %3 : vector<2x16x128xf32> to vector<2x1x16x128xf32>
    tpu.vector_store %arg3[%c0_6, %c1, %c0_7, %c0_8], %9 {strides = array<i32>} : memref<2x2x16x128xf32, #tpu.memory_space<vmem>>, vector<2x1x16x128xf32>,
    return
  }
  func.func @transform_0(%arg0: i32, %arg1: i32) -> (i32, i32, i32) {
    %c0_i32 = arith.constant 0 : i32
    %c0_i32_0 = arith.constant 0 : i32
    return %arg0, %arg1, %c0_i32 : i32, i32, i32
  }
  func.func @transform_1(%arg0: i32, %arg1: i32) -> (i32, i32, i32, i32) {
    %c0_i32 = arith.constant 0 : i32
    %c0_i32_0 = arith.constant 0 : i32
    %c0_i32_1 = arith.constant 0 : i32
    return %arg0, %c0_i32, %arg1, %c0_i32_0 : i32, i32, i32, i32
  }
}

</mosaic_0001>

<llo_original>
// kernel: tpu_custom_call.1
$region0: #{tpu_custom_call.1}
  #allocation0 [shape = 'u32[]', space=smem, size = 0x4, offset = 0x4, fixed_abs, tag = 'smem constant byte address 0x4 - core index']
  #allocation1 [shape = 'u32[72,128]{1,0:T(1,128)}', space=vmem, size = 0x9000, scoped, tag = 'internal scratch']
  %s0 = inlined_call_operand.hbm [shape: f32[2,16,128], index: 0, kind: input, shape index: {}]
  %s1 = inlined_call_operand.hbm [shape: f32[2,2,16,128], index: 1, kind: output, shape index: {}]
  %s2 = sld [smem:[#allocation0]]
  $region18: #{tpu_custom_call.1} parent=0
    _
  %s4 = ssub.s32 1, %s2
  %s5 = scalar_select 0, %s4, %s2
  $region1: #{tpu_custom_call.1} parent=0
    #allocation2 [shape = 'u8[16384]{0}', space=vmem, size = 0x4000, scoped, tag = 'input window, operand 0, single buffered']
    #allocation3 [shape = 's32[1]{0}', space=sflag, size = 0x4, scoped, tag = 'scoped memory for tpu_custom_call.1']
    #allocation4 [shape = 's32[1]{0}', space=sflag, size = 0x4, scoped, tag = 'scoped memory for tpu_custom_call.1']
    #allocation5 [shape = 'u8[32768]{0}', space=vmem, size = 0x8000, scoped, tag = 'output window, operand 0, single buffered']
    %6 = vsyncpa [#allocation3], 0
    %7 = vsyncpa [#allocation4], 0
    // Predicated region
    $region2: #{tpu_custom_call.1} parent=1 // pred_check
      _
    $region3: #{tpu_custom_call.1} parent=1 // pred_check_branch
      %9 = sbr.rel (0) target = $region5
    $region4: #{tpu_custom_call.1} parent=1 // pred_region
      %11 = vsyncadd [#allocation3], 0
      %s12 = sshll.u32 %s0, 4
      %s13 = int_to_ptr.hbm [resolvable:$true] %s12
      %s14 = sshll.u32 [#allocation2], 4
      %s15 = int_to_ptr.vmem [resolvable:$true] %s14
      %20 = dma.hbm_to_vmem [thread:$0]  %s13, 512, %s15, [#allocation3], 128, 128, 8
    $region5: #{tpu_custom_call.1} parent=1 // pred_fallthru
      _
    // Predicated region
    $region6: #{tpu_custom_call.1} parent=1 // pred_check
      _
    $region7: #{tpu_custom_call.1} parent=1 // pred_check_branch
      %22 = sbr.rel (0) target = $region9
    $region8: #{tpu_custom_call.1} parent=1 // pred_region
      %24 = dma.done [#allocation3], 512
    $region9: #{tpu_custom_call.1} parent=1 // pred_fallthru
      _
    %v25 = vld [vmem:[#allocation2] sm:$0xff]
    %v26 = vld [vmem:[#allocation2 + $0x8] sm:$0xff]
    %v27 = vld [vmem:[#allocation2 + $0x10] sm:$0xff]
    %v28 = vld [vmem:[#allocation2 + $0x18] sm:$0xff]
    %v29 = vmax.f32 %v25, 0.0
    %v30 = vmax.f32 %v26, 0.0
    %v31 = vmax.f32 %v27, 0.0
    %v32 = vmax.f32 %v28, 0.0
    %v33 = vtanh.pop %v29
    %v34 = vtanh.pop %v30
    %v35 = vtanh.pop %v31
    %v36 = vtanh.pop %v32
    %37 = vst [vmem:[#allocation5] sm:$0xff] %v33
    %38 = vst [vmem:[#allocation5 + $0x8] sm:$0xff] %v34
    %39 = vst [vmem:[#allocation5 + $0x20] sm:$0xff] %v35
    %40 = vst [vmem:[#allocation5 + $0x28] sm:$0xff] %v36
    %s41 = scalar_lea.vmem [#allocation5], 16
    %42 = vst [vmem:[%s41] sm:$0xff] %v33
    %43 = vst [vmem:[%s41 + $0x8] sm:$0xff] %v34
    %44 = vst [vmem:[%s41 + $0x20] sm:$0xff] %v35
    %45 = vst [vmem:[%s41 + $0x28] sm:$0xff] %v36
    // Predicated region
    $region10: #{tpu_custom_call.1} parent=1 // pred_check
      _
    $region11: #{tpu_custom_call.1} parent=1 // pred_check_branch
      %47 = sbr.rel (0) target = $region13
    $region12: #{tpu_custom_call.1} parent=1 // pred_region
      %49 = vsyncadd [#allocation4], 0
      %s50 = sshll.u32 [#allocation5], 4
      %s51 = int_to_ptr.vmem [resolvable:$true] %s50
      %s52 = sshll.u32 %s1, 4
      %s53 = int_to_ptr.hbm [resolvable:$true] %s52
      %58 = dma.vmem_to_hbm [thread:$0]  %s51, 1024, %s53, [#allocation4], 128, 128, 8
    $region13: #{tpu_custom_call.1} parent=1 // pred_fallthru
      _
    // Predicated region
    $region14: #{tpu_custom_call.1} parent=1 // pred_check
      _
    $region15: #{tpu_custom_call.1} parent=1 // pred_check_branch
      %60 = sbr.rel (0) target = $region17
    $region16: #{tpu_custom_call.1} parent=1 // pred_region
      %62 = dma.done [#allocation4], 1024
    $region17: #{tpu_custom_call.1} parent=1 // pred_fallthru
      _
    %63 = vsyncpa [#allocation3], 1
    %64 = vsyncpa [#allocation4], 1

</llo_original>
